<compile_context>
chip_gen: v7x
topology: tpu7x:2x2x1
jax: 0.10.0
libtpu: 0.0.40
codegen_flags: <defaults>
</compile_context>

<pallas_src>
import functools

import jax
import jax.numpy as jnp
from jax.experimental import pallas as pl
from jax.experimental.pallas import tpu as pltpu

H_A = 200                  # actor hidden width
H_C = 100                  # critic hidden width
H_FUSED = H_A + H_C        # 300 fused hidden
H_PAD = 384                # fused hidden padded to a lane/MXU-aligned multiple of 128
NH = 128                   # lane-dense fused-head / output width
_TB_CAP = 2048             # max batch-tile rows (~9 MB VMEM incl. temps & double-buffers)


def _round_up(n, m):
    return ((n + m - 1) // m) * m


def _pick_tiling(b):
    """Pick (tile_rows, padded_rows). For b <= cap: one tile, no padding at all."""
    if b <= _TB_CAP:
        return b, b
    n_tiles = pl.cdiv(b, _TB_CAP)                       # >= 2 tiles -> dual-TC sharding
    tb = _round_up(pl.cdiv(b, n_tiles), 256)            # large, 256-aligned tiles
    return tb, tb * n_tiles


# ---------------------------------------------------------------------------
# Kernel
# ---------------------------------------------------------------------------
def _continuous_net_kernel(x_ref, wt_ref, bt_ref, wh_ref, bh_ref, out_ref, *, a_dim):
    x = x_ref[...]

    # Fused trunk: one MXU pass -> [a1 | c1 | 0-pad], then relu6 (pad cols stay 0).
    h = jnp.dot(x, wt_ref[...], preferred_element_type=jnp.float32) + bt_ref[...]
    h = jnp.clip(h, 0.0, 6.0)

    # Fused block-diagonal head: one MXU pass -> [mu_logit | sigma_logit | v | 0-pad].
    head = jnp.dot(h, wh_ref[...], preferred_element_type=jnp.float32) + bh_ref[...]

    # Per-column activation via lane select; single lane-dense (TB, 128) store.
    lane = jax.lax.broadcasted_iota(jnp.int32, head.shape, 1)
    mu_all = 2.0 * jnp.tanh(head)
    sig_all = jnp.logaddexp(head, 0.0) + 0.001          # stable softplus + 1e-3
    out_ref[...] = jnp.where(
        lane < a_dim, mu_all,
        jnp.where(lane < 2 * a_dim, sig_all, head))


# ---------------------------------------------------------------------------
# Parameter fusion (call ONCE per parameter update, not per forward)
# ---------------------------------------------------------------------------
def fuse_params(params):
    """Pack the 5 Linear layers into fused trunk/head weights (hoisted off hot path)."""
    s_dim = params["wa1"].shape[0]
    a_dim = params["wmu"].shape[1]
    assert 2 * a_dim + 1 <= NH, "a_dim too large for the 128-lane fused head"

    w_trunk = jnp.zeros((s_dim, H_PAD), jnp.float32)
    w_trunk = w_trunk.at[:, :H_A].set(params["wa1"])
    w_trunk = w_trunk.at[:, H_A:H_FUSED].set(params["wc1"])
    b_trunk = jnp.zeros((1, H_PAD), jnp.float32)
    b_trunk = b_trunk.at[:, :H_A].set(params["ba1"])
    b_trunk = b_trunk.at[:, H_A:H_FUSED].set(params["bc1"])

    w_head = jnp.zeros((H_PAD, NH), jnp.float32)
    w_head = w_head.at[:H_A, :a_dim].set(params["wmu"])
    w_head = w_head.at[:H_A, a_dim:2 * a_dim].set(params["wsig"])
    w_head = w_head.at[H_A:H_FUSED, 2 * a_dim:2 * a_dim + 1].set(params["wv"])
    b_head = jnp.zeros((1, NH), jnp.float32)
    b_head = b_head.at[:, :a_dim].set(params["bmu"])
    b_head = b_head.at[:, a_dim:2 * a_dim].set(params["bsig"])
    b_head = b_head.at[:, 2 * a_dim:2 * a_dim + 1].set(params["bv"])

    return dict(w_trunk=w_trunk, b_trunk=b_trunk, w_head=w_head, b_head=b_head)


# ---------------------------------------------------------------------------
# Forward wrappers
# ---------------------------------------------------------------------------
def _forward_slab(x, fused, a_dim):
    """Core pallas_call. Returns the lane-dense (B, 128) slab [mu | sigma | v | pad]."""
    B, s_dim = x.shape
    tb, b_pad = _pick_tiling(B)
    # No padding copy at all when B fits in one tile; otherwise pad only the remainder.
    x_p = x if b_pad == B else jnp.pad(x, ((0, b_pad - B), (0, 0)))

    kernel = functools.partial(_continuous_net_kernel, a_dim=a_dim)
    flops = 2 * b_pad * (s_dim * H_PAD + H_PAD * NH)
    transcendentals = 3 * b_pad * NH                       # tanh + exp + log per lane
    bytes_accessed = 4 * (b_pad * s_dim + s_dim * H_PAD + H_PAD
                          + H_PAD * NH + NH + b_pad * NH)

    out = pl.pallas_call(
        kernel,
        out_shape=jax.ShapeDtypeStruct((b_pad, NH), jnp.float32),
        grid=(b_pad // tb,),
        in_specs=[
            pl.BlockSpec((tb, s_dim), lambda i: (i, 0)),      # x tile (rows pipelined)
            pl.BlockSpec((s_dim, H_PAD), lambda i: (0, 0)),   # fused trunk weight (pinned)
            pl.BlockSpec((1, H_PAD), lambda i: (0, 0)),       # fused trunk bias
            pl.BlockSpec((H_PAD, NH), lambda i: (0, 0)),      # fused head weight (pinned)
            pl.BlockSpec((1, NH), lambda i: (0, 0)),          # fused head bias
        ],
        out_specs=pl.BlockSpec((tb, NH), lambda i: (i, 0)),   # lane-dense output slab
        compiler_params=pltpu.CompilerParams(
            dimension_semantics=("parallel",),
            vmem_limit_bytes=32 * 1024 * 1024),
        cost_estimate=pl.CostEstimate(
            flops=flops,
            transcendentals=transcendentals,
            bytes_accessed=bytes_accessed),
    )(x_p, fused["w_trunk"], fused["b_trunk"], fused["w_head"], fused["b_head"])
    return out[:B]


@functools.partial(jax.jit, static_argnames=("a_dim",))
def continuous_net_forward_fused(x, fused, *, a_dim):
    """Returns the raw (B, 128) slab; valid region is columns [0 : 2*a_dim+1]."""
    return _forward_slab(x, fused, a_dim)


@functools.partial(jax.jit, static_argnames=("a_dim",))
def continuous_net_forward(x, fused, *, a_dim):
    """PyTorch-compatible API: returns (mu, sigma, values)."""
    out = _forward_slab(x, fused, a_dim)
    mu = out[:, :a_dim]
    sigma = out[:, a_dim:2 * a_dim]
    values = out[:, 2 * a_dim:2 * a_dim + 1]
    return mu, sigma, values


# ---------------------------------------------------------------------------
# Synthetic init + pure-JAX reference
# ---------------------------------------------------------------------------
def init_params(key, s_dim, a_dim):
    """Deterministic synthetic init (set_init uses normal(0, 0.1) weights, zero bias)."""
    ks = jax.random.split(key, 5)

    def layer(k, fan_in, fan_out):
        w = 0.1 * jax.random.normal(k, (fan_in, fan_out), dtype=jnp.float32)
        b = jnp.zeros((1, fan_out), dtype=jnp.float32)
        return w, b

    wa1, ba1 = layer(ks[0], s_dim, H_A)
    wmu, bmu = layer(ks[1], H_A, a_dim)
    wsig, bsig = layer(ks[2], H_A, a_dim)
    wc1, bc1 = layer(ks[3], s_dim, H_C)
    wv, bv = layer(ks[4], H_C, 1)
    return dict(
        wa1=wa1, ba1=ba1,
        wmu=wmu, bmu=bmu,
        wsig=wsig, bsig=bsig,
        wc1=wc1, bc1=bc1,
        wv=wv, bv=bv,
    )


def _reference_forward(x, p):
    a1 = jnp.clip(x @ p["wa1"] + p["ba1"], 0.0, 6.0)
    mu = 2.0 * jnp.tanh(a1 @ p["wmu"] + p["bmu"])
    sigma = jax.nn.softplus(a1 @ p["wsig"] + p["bsig"]) + 0.001
    c1 = jnp.clip(x @ p["wc1"] + p["bc1"], 0.0, 6.0)
    values = c1 @ p["wv"] + p["bv"]
    return mu, sigma, values


if __name__ == "__main__":
    key = jax.random.PRNGKey(0)
    k_x, k_p = jax.random.split(key)

    B, s_dim, a_dim = 2, 16, 4
    x = jax.random.normal(k_x, (B, s_dim), dtype=jnp.float32)
    params = init_params(k_p, s_dim, a_dim)

    # Parameter fusion is done once, outside the per-step forward.
    fused = fuse_params(params)
    fused = jax.tree_util.tree_map(jax.block_until_ready, fused)

    mu, sigma, values = continuous_net_forward(x, fused, a_dim=a_dim)
    jax.block_until_ready((mu, sigma, values))

    # sanity check against plain-JAX reference
    mu_r, sigma_r, values_r = _reference_forward(x, params)
    assert mu.shape == (B, a_dim) and sigma.shape == (B, a_dim) and values.shape == (B, 1)
    assert jnp.allclose(mu, mu_r, atol=1e-5), "mu mismatch"
    assert jnp.allclose(sigma, sigma_r, atol=1e-5), "sigma mismatch"
    assert jnp.allclose(values, values_r, atol=1e-5), "values mismatch"

    print("KERNEL_OK")
</pallas_src>

<mosaic_0001>
module attributes {stable_mosaic.version = 11 : i64} {
  func.func @_continuous_net_kernel(%arg0: i32, %arg1: memref<2x16xf32, #tpu.memory_space<vmem>>, %arg2: memref<16x384xf32, #tpu.memory_space<vmem>>, %arg3: memref<1x384xf32, #tpu.memory_space<vmem>>, %arg4: memref<384x128xf32, #tpu.memory_space<vmem>>, %arg5: memref<1x128xf32, #tpu.memory_space<vmem>>, %arg6: memref<2x128xf32, #tpu.memory_space<vmem>>) attributes {dimension_semantics = [#tpu.dimension_semantics<parallel>], iteration_bounds = array<i64: 1>, scalar_prefetch = 0 : i64, scratch_operands = 0 : i64, tpu.core_type = #tpu.core_type<tc>, window_params = [{transform_indices = @transform_0, window_bounds = array<i64: 2, 16>}, {pipeline_mode = #tpu.pipeline_mode<synchronous>, transform_indices = @transform_1, window_bounds = array<i64: 16, 384>}, {pipeline_mode = #tpu.pipeline_mode<synchronous>, transform_indices = @transform_2, window_bounds = array<i64: 1, 384>}, {pipeline_mode = #tpu.pipeline_mode<synchronous>, transform_indices = @transform_3, window_bounds = array<i64: 384, 128>}, {pipeline_mode = #tpu.pipeline_mode<synchronous>, transform_indices = @transform_4, window_bounds = array<i64: 1, 128>}, {transform_indices = @transform_5, window_bounds = array<i64: 2, 128>}]} {
    %c0 = arith.constant 0 : index
    %c0_0 = arith.constant 0 : index
    %0 = vector.load %arg1[%c0, %c0_0] : memref<2x16xf32, #tpu.memory_space<vmem>>, vector<2x16xf32>
    %c0_1 = arith.constant 0 : index
    %c0_2 = arith.constant 0 : index
    %1 = vector.load %arg2[%c0_1, %c0_2] : memref<16x384xf32, #tpu.memory_space<vmem>>, vector<16x384xf32>
    %cst = arith.constant dense<0.000000e+00> : vector<2x384xf32>
    %2 = tpu.matmul %0, %1, %cst {dimension_numbers = #tpu.dot_dimension_numbers<[1], [0], [0], [1], [0, 0, 1, 1], [], []>} : vector<2x16xf32>, vector<16x384xf32>, vector<2x384xf32> -> vector<2x384xf32>
    %c0_3 = arith.constant 0 : index
    %c0_4 = arith.constant 0 : index
    %3 = vector.load %arg3[%c0_3, %c0_4] : memref<1x384xf32, #tpu.memory_space<vmem>>, vector<1x384xf32>
    %4 = vector.broadcast %3 : vector<1x384xf32> to vector<2x384xf32>
    %5 = arith.addf %2, %4 : vector<2x384xf32>
    %cst_5 = arith.constant 0.000000e+00 : f32
    %cst_6 = arith.constant 6.000000e+00 : f32
    %6 = vector.broadcast %cst_5 : f32 to vector<2x384xf32>
    %7 = arith.maximumf %6, %5 : vector<2x384xf32>
    %8 = vector.broadcast %cst_6 : f32 to vector<2x384xf32>
    %9 = arith.minimumf %8, %7 : vector<2x384xf32>
    %c0_7 = arith.constant 0 : index
    %c0_8 = arith.constant 0 : index
    %10 = vector.load %arg4[%c0_7, %c0_8] : memref<384x128xf32, #tpu.memory_space<vmem>>, vector<384x128xf32>
    %cst_9 = arith.constant dense<0.000000e+00> : vector<2x128xf32>
    %11 = tpu.matmul %9, %10, %cst_9 {dimension_numbers = #tpu.dot_dimension_numbers<[1], [0], [0], [1], [0, 0, 1, 1], [], []>} : vector<2x384xf32>, vector<384x128xf32>, vector<2x128xf32> -> vector<2x128xf32>
    %c0_10 = arith.constant 0 : index
    %c0_11 = arith.constant 0 : index
    %12 = vector.load %arg5[%c0_10, %c0_11] : memref<1x128xf32, #tpu.memory_space<vmem>>, vector<1x128xf32>
    %13 = vector.broadcast %12 : vector<1x128xf32> to vector<2x128xf32>
    %14 = arith.addf %11, %13 : vector<2x128xf32>
    %15 = tpu.iota {dimensions = array<i32: 1>} : vector<2x128xi32>
    %16 = math.tanh %14 : vector<2x128xf32>
    %cst_12 = arith.constant 2.000000e+00 : f32
    %17 = vector.broadcast %cst_12 : f32 to vector<2x128xf32>
    %18 = arith.mulf %17, %16 : vector<2x128xf32>
    %cst_13 = arith.constant 0.000000e+00 : f32
    %19 = vector.broadcast %cst_13 : f32 to vector<2x128xf32>
    %20 = arith.maximumf %14, %19 : vector<2x128xf32>
    %21 = vector.broadcast %cst_13 : f32 to vector<2x128xf32>
    %22 = arith.subf %14, %21 : vector<2x128xf32>
    %23 = arith.cmpf one, %22, %22 : vector<2x128xf32>
    %24 = vector.broadcast %cst_13 : f32 to vector<2x128xf32>
    %25 = arith.addf %14, %24 : vector<2x128xf32>
    %26 = math.absf %22 : vector<2x128xf32>
    %cst_14 = arith.constant 0.000000e+00 : f32
    %27 = vector.broadcast %cst_14 : f32 to vector<2x128xf32>
    %28 = arith.subf %27, %26 : vector<2x128xf32>
    %29 = math.exp %28 : vector<2x128xf32>
    %30 = math.log1p %29 : vector<2x128xf32>
    %31 = arith.addf %20, %30 : vector<2x128xf32>
    %32 = arith.select %23, %25, %31 : vector<2x128xi1>, vector<2x128xf32>
    %cst_15 = arith.constant 1.000000e-03 : f32
    %33 = vector.broadcast %cst_15 : f32 to vector<2x128xf32>
    %34 = arith.addf %32, %33 : vector<2x128xf32>
    %c4_i32 = arith.constant 4 : i32
    %35 = vector.broadcast %c4_i32 : i32 to vector<2x128xi32>
    %36 = arith.cmpi slt, %15, %35 : vector<2x128xi32>
    %c8_i32 = arith.constant 8 : i32
    %37 = vector.broadcast %c8_i32 : i32 to vector<2x128xi32>
    %38 = arith.cmpi slt, %15, %37 : vector<2x128xi32>
    %39 = arith.select %38, %34, %14 : vector<2x128xi1>, vector<2x128xf32>
    %40 = arith.select %36, %18, %39 : vector<2x128xi1>, vector<2x128xf32>
    %c0_16 = arith.constant 0 : index
    %c0_17 = arith.constant 0 : index
    %41 = vector.load %arg6[%c0_16, %c0_17] : memref<2x128xf32, #tpu.memory_space<vmem>>, vector<2x128xf32>
    tpu.vector_store %arg6[%c0_16, %c0_17], %40 {strides = array<i32>} : memref<2x128xf32, #tpu.memory_space<vmem>>, vector<2x128xf32>,
    return
  }
  func.func @transform_0(%arg0: i32) -> (i32, i32) {
    %c0_i32 = arith.constant 0 : i32
    %c0_i32_0 = arith.constant 0 : i32
    return %arg0, %c0_i32 : i32, i32
  }
  func.func @transform_1(%arg0: i32) -> (i32, i32) {
    %c0_i32 = arith.constant 0 : i32
    %c0_i32_0 = arith.constant 0 : i32
    %c0_i32_1 = arith.constant 0 : i32
    return %c0_i32, %c0_i32_0 : i32, i32
  }
  func.func @transform_2(%arg0: i32) -> (i32, i32) {
    %c0_i32 = arith.constant 0 : i32
    %c0_i32_0 = arith.constant 0 : i32
    %c0_i32_1 = arith.constant 0 : i32
    return %c0_i32, %c0_i32_0 : i32, i32
  }
  func.func @transform_3(%arg0: i32) -> (i32, i32) {
    %c0_i32 = arith.constant 0 : i32
    %c0_i32_0 = arith.constant 0 : i32
    %c0_i32_1 = arith.constant 0 : i32
    return %c0_i32, %c0_i32_0 : i32, i32
  }
  func.func @transform_4(%arg0: i32) -> (i32, i32) {
    %c0_i32 = arith.constant 0 : i32
    %c0_i32_0 = arith.constant 0 : i32
    %c0_i32_1 = arith.constant 0 : i32
    return %c0_i32, %c0_i32_0 : i32, i32
  }
  func.func @transform_5(%arg0: i32) -> (i32, i32) {
    %c0_i32 = arith.constant 0 : i32
    %c0_i32_0 = arith.constant 0 : i32
    return %arg0, %c0_i32 : i32, i32
  }
}

</mosaic_0001>

<llo_original>
// kernel: continuous_net_forward.1
$region0: #{continuous_net_forward.1}
  #allocation0 [shape = 'u32[]', space=smem, size = 0x4, offset = 0x4, fixed_abs, tag = 'smem constant byte address 0x4 - core index']
  #allocation1 [shape = 'u32[144,128]{1,0:T(1,128)}', space=vmem, size = 0x12000, scoped, tag = 'internal scratch']
  %s0 = inlined_call_operand.hbm [shape: f32[2,16], index: 0, kind: input, shape index: {}]
  %s1 = inlined_call_operand.hbm [shape: f32[16,384], index: 1, kind: input, shape index: {}]
  %s2 = inlined_call_operand.vmem [shape: f32[1,384], index: 2, kind: input, shape index: {}]
  %s3 = inlined_call_operand.hbm [shape: f32[384,128], index: 3, kind: input, shape index: {}]
  %s4 = inlined_call_operand.vmem [shape: f32[1,128], index: 4, kind: input, shape index: {}]
  %s5 = inlined_call_operand.vmem [shape: f32[2,128], index: 5, kind: output, shape index: {}]
  %s6 = sld [smem:[#allocation0]]
  $region42: #{continuous_net_forward.1} parent=0
    _
  %s8 = ssub.s32 1, %s6
  %s9 = scalar_select 0, %s8, %s6
  $region1: #{continuous_net_forward.1} parent=0
    #allocation2 [shape = 'u8[1024]{0}', space=vmem, size = 0x400, scoped, tag = 'input window, operand 0, single buffered']
    #allocation3 [shape = 's32[1]{0}', space=sflag, size = 0x4, scoped, tag = 'scoped memory for continuous_net_forward.1']
    #allocation4 [shape = 'u8[24576]{0}', space=vmem, size = 0x6000, scoped, tag = 'input window, operand 1, single buffered']
    #allocation5 [shape = 's32[1]{0}', space=sflag, size = 0x4, scoped, tag = 'scoped memory for continuous_net_forward.1']
    #allocation6 [shape = 'u8[196608]{0}', space=vmem, size = 0x30000, scoped, tag = 'input window, operand 3, single buffered']
    %10 = vsyncpa [#allocation3], 0
    %11 = vsyncpa [#allocation5], 0
    // Predicated region
    $region2: #{continuous_net_forward.1} parent=1 // pred_check
      _
    $region3: #{continuous_net_forward.1} parent=1 // pred_check_branch
      %13 = sbr.rel (0) target = $region5
    $region4: #{continuous_net_forward.1} parent=1 // pred_region
      %s15 = ssub.s32 32, 32
      %16 = vsyncadd [#allocation3], %s15
      %s18 = sshll.u32 [#allocation2], 4
      %s19 = int_to_ptr.vmem [resolvable:$true] %s18
      %21 = dma.hbm_to_vmem [thread:$0]  %s0, 32, %s19, [#allocation3]
    $region5: #{continuous_net_forward.1} parent=1 // pred_fallthru
      _
    // Predicated region
    $region6: #{continuous_net_forward.1} parent=1 // pred_check
      _
    $region7: #{continuous_net_forward.1} parent=1 // pred_check_branch
      %23 = sbr.rel (0) target = $region9
    $region8: #{continuous_net_forward.1} parent=1 // pred_region
      %s25 = ssub.s32 768, 768
      %26 = vsyncadd [#allocation5], %s25
      %s27 = sshll.u32 [#allocation4], 4
      %s28 = int_to_ptr.vmem [resolvable:$true] %s27
      %33 = dma.hbm_to_vmem [thread:$0]  %s1, 768, %s28, [#allocation5], 384, 384, 24
    $region9: #{continuous_net_forward.1} parent=1 // pred_fallthru
      _
    // Predicated region
    $region10: #{continuous_net_forward.1} parent=1 // pred_check
      _
    $region11: #{continuous_net_forward.1} parent=1 // pred_check_branch
      %35 = sbr.rel (0) target = $region13
    $region12: #{continuous_net_forward.1} parent=1 // pred_region
      _
    $region13: #{continuous_net_forward.1} parent=1 // pred_fallthru
      _
    // Predicated region
    $region14: #{continuous_net_forward.1} parent=1 // pred_check
      _
    $region15: #{continuous_net_forward.1} parent=1 // pred_check_branch
      %37 = sbr.rel (0) target = $region17
    $region16: #{continuous_net_forward.1} parent=1 // pred_region
      %s39 = ssub.s32 6144, 6144
      %40 = vsyncadd [#allocation5], %s39
      %s41 = sshll.u32 [#allocation6], 4
      %s42 = int_to_ptr.vmem [resolvable:$true] %s41
      %47 = dma.hbm_to_vmem [thread:$0]  %s3, 6144, %s42, [#allocation5], 128, 128, 8
    $region17: #{continuous_net_forward.1} parent=1 // pred_fallthru
      _
    // Predicated region
    $region18: #{continuous_net_forward.1} parent=1 // pred_check
      _
    $region19: #{continuous_net_forward.1} parent=1 // pred_check_branch
      %49 = sbr.rel (0) target = $region21
    $region20: #{continuous_net_forward.1} parent=1 // pred_region
      _
    $region21: #{continuous_net_forward.1} parent=1 // pred_fallthru
      _
    // Predicated region
    $region22: #{continuous_net_forward.1} parent=1 // pred_check
      _
    $region23: #{continuous_net_forward.1} parent=1 // pred_check_branch
      %51 = sbr.rel (0) target = $region25
    $region24: #{continuous_net_forward.1} parent=1 // pred_region
      %52 = dma.done [#allocation3], 32
    $region25: #{continuous_net_forward.1} parent=1 // pred_fallthru
      _
    // Predicated region
    $region26: #{continuous_net_forward.1} parent=1 // pred_check
      _
    $region27: #{continuous_net_forward.1} parent=1 // pred_check_branch
      %54 = sbr.rel (0) target = $region29
    $region28: #{continuous_net_forward.1} parent=1 // pred_region
      %55 = dma.done [#allocation5], 768
    $region29: #{continuous_net_forward.1} parent=1 // pred_fallthru
      _
    // Predicated region
    $region30: #{continuous_net_forward.1} parent=1 // pred_check
      _
    $region31: #{continuous_net_forward.1} parent=1 // pred_check_branch
      %57 = sbr.rel (0) target = $region33
    $region32: #{continuous_net_forward.1} parent=1 // pred_region
      %58 = dma.done [#allocation5], 6144
    $region33: #{continuous_net_forward.1} parent=1 // pred_fallthru
      _
    %v59 = vld [vmem:[#allocation2] sm:$0x3]
    %v60 = vld [vmem:[#allocation4] sm:$0xff]
    %v61 = vld [vmem:[#allocation4 + $0x8] sm:$0xff]
    %v62 = vld [vmem:[#allocation4 + $0x10] sm:$0xff]
    %v63 = vld [vmem:[#allocation4 + $0x18] sm:$0xff]
    %v64 = vld [vmem:[#allocation4 + $0x20] sm:$0xff]
    %v65 = vld [vmem:[#allocation4 + $0x28] sm:$0xff]
    %v66 = vld [vmem:[%s2] sm:$0x7]
    %v68 = vlaneseq
    %v69 = vshrl.u32 %v68, 7
    %v70 = vsub.s32 0, %v69
    %v71 = vrot.slane %v66, %v70
    %v72 = vlaneseq
    %v73 = vshrl.u32 %v72, 7
    %v74 = vsub.s32 1, %v73
    %v75 = vrot.slane %v66, %v74
    %v76 = vlaneseq
    %v77 = vshrl.u32 %v76, 7
    %v78 = vsub.s32 2, %v77
    %v79 = vrot.slane %v66, %v78
    %vm83 = vcmask 130048
    %v85 = vsel %vm83, %v59, 0
    %87 = vmatprep.subr.mxu0 %v61
    %88 = vmatpush1.msra.mxu0 %v60
    %89 = vmatprep.subr.mxu0 %v64
    %90 = vmatpush1.msra.mxu0 %v63
    %91 = vmatprep.subr.mxu0 0.0
    %92 = vmatpush1.msra.mxu0 0.0
    %93 = vmatprep.subr.mxu0 0.0
    %94 = vmatpush1.msra.mxu0 0.0
    %95 = vmatprep.subr.mxu0 0.0
    %96 = vmatpush1.msra.mxu0 0.0
    %97 = vmatprep.subr.mxu0 0.0
    %98 = vmatpush1.msra.mxu0 0.0
    %99 = vmatprep.subr.mxu0 0.0
    %100 = vmatpush1.msra.mxu0 0.0
    %101 = vmatprep.subr.mxu0 0.0
    %102 = vmatpush1.msra.mxu0 0.0
    %103 = vmatprep.subr.mxu0 0.0
    %104 = vmatpush1.msra.mxu0 0.0
    %105 = vmatprep.subr.mxu0 0.0
    %106 = vmatpush1.msra.mxu0 0.0
    %107 = vmatprep.subr.mxu0 0.0
    %108 = vmatpush1.msra.mxu0 0.0
    %109 = vmatprep.subr.mxu0 0.0
    %110 = vmatpush1.msra.mxu0 0.0
    %111 = vmatprep.subr.mxu0 0.0
    %112 = vmatpush1.msra.mxu0 0.0
    %113 = vmatprep.subr.mxu0 0.0
    %114 = vmatpush1.msra.mxu0 0.0
    %115 = vmatprep.subr.mxu0 0.0
    %116 = vmatpush1.msra.mxu0 0.0
    %117 = vmatprep.subr.mxu0 0.0
    %118 = vmatpush1.msra.mxu0 0.0
    %119 = vmatprep.subr.mxu0 0.0
    %120 = vmatpush1.msra.mxu0 0.0
    %121 = vmatprep.subr.mxu0 0.0
    %122 = vmatpush1.msra.mxu0 0.0
    %123 = vmatprep.subr.mxu0 0.0
    %124 = vmatpush1.msra.mxu0 0.0
    %125 = vmatprep.subr.mxu0 0.0
    %126 = vmatpush1.msra.mxu0 0.0
    %127 = vmatprep.subr.mxu0 0.0
    %128 = vmatpush1.msra.mxu0 0.0
    %129 = vmatprep.subr.mxu0 0.0
    %130 = vmatpush1.msra.mxu0 0.0
    %131 = vmatprep.subr.mxu0 0.0
    %132 = vmatpush1.msra.mxu0 0.0
    %133 = vmatprep.subr.mxu0 0.0
    %134 = vmatpush1.msra.mxu0 0.0
    %135 = vmatprep.subr.mxu0 0.0
    %136 = vmatpush1.msra.mxu0 0.0
    %137 = vmatprep.subr.mxu0 0.0
    %138 = vmatpush1.msra.mxu0 0.0
    %139 = vmatprep.subr.mxu0 0.0
    %140 = vmatpush1.msra.mxu0 0.0
    %141 = vmatprep.subr.mxu0 0.0
    %142 = vmatpush1.msra.mxu0 0.0
    %143 = vmatprep.subr.mxu0 0.0
    %144 = vmatpush1.msra.mxu0 0.0
    %145 = vmatprep.subr.mxu0 0.0
    %146 = vmatpush1.msra.mxu0 0.0
    %147 = vmatprep.subr.mxu0 0.0
    %148 = vmatpush1.msra.mxu0 0.0
    %149 = vmatprep.subr.mxu0 0.0
    %150 = vmatpush1.msra.mxu0 0.0
    %151 = vmatprep.mubr.f32.mxu0 0.0
    %152 = vmatmul.mubr.f32.gmra.mrb[0].mxu0 %v85
    %v153 = vpop.f32.mrb[0].mxu0
    %v154 = vadd.f32 %v71, %v153
    %v155 = vpop.f32.mrb[0].mxu0
    %v156 = vadd.f32 %v75, %v155
    %157 = vdwg.mxu0
    %158 = vmatprep.subr.mxu0 0.0
    %159 = vmatpush1.msra.mxu0 %v62
    %160 = vmatprep.subr.mxu0 0.0
    %161 = vmatpush1.msra.mxu0 %v65
    %162 = vmatprep.subr.mxu0 0.0
    %163 = vmatpush1.msra.mxu0 0.0
    %164 = vmatprep.subr.mxu0 0.0
    %165 = vmatpush1.msra.mxu0 0.0
    %166 = vmatprep.subr.mxu0 0.0
    %167 = vmatpush1.msra.mxu0 0.0
    %168 = vmatprep.subr.mxu0 0.0
    %169 = vmatpush1.msra.mxu0 0.0
    %170 = vmatprep.subr.mxu0 0.0
    %171 = vmatpush1.msra.mxu0 0.0
    %172 = vmatprep.subr.mxu0 0.0
    %173 = vmatpush1.msra.mxu0 0.0
    %174 = vmatprep.subr.mxu0 0.0
    %175 = vmatpush1.msra.mxu0 0.0
    %176 = vmatprep.subr.mxu0 0.0
    %177 = vmatpush1.msra.mxu0 0.0
    %178 = vmatprep.subr.mxu0 0.0
    %179 = vmatpush1.msra.mxu0 0.0
    %180 = vmatprep.subr.mxu0 0.0
    %181 = vmatpush1.msra.mxu0 0.0
    %182 = vmatprep.subr.mxu0 0.0
    %183 = vmatpush1.msra.mxu0 0.0
    %184 = vmatprep.subr.mxu0 0.0
    %185 = vmatpush1.msra.mxu0 0.0
    %186 = vmatprep.subr.mxu0 0.0
    %187 = vmatpush1.msra.mxu0 0.0
    %188 = vmatprep.subr.mxu0 0.0
    %189 = vmatpush1.msra.mxu0 0.0
    %190 = vmatprep.subr.mxu0 0.0
    %191 = vmatpush1.msra.mxu0 0.0
    %192 = vmatprep.subr.mxu0 0.0
    %193 = vmatpush1.msra.mxu0 0.0
    %194 = vmatprep.subr.mxu0 0.0
    %195 = vmatpush1.msra.mxu0 0.0
    %196 = vmatprep.subr.mxu0 0.0
    %197 = vmatpush1.msra.mxu0 0.0
    %198 = vmatprep.subr.mxu0 0.0
    %199 = vmatpush1.msra.mxu0 0.0
    %200 = vmatprep.subr.mxu0 0.0
    %201 = vmatpush1.msra.mxu0 0.0
    %202 = vmatprep.subr.mxu0 0.0
    %203 = vmatpush1.msra.mxu0 0.0
    %204 = vmatprep.subr.mxu0 0.0
    %205 = vmatpush1.msra.mxu0 0.0
    %206 = vmatprep.subr.mxu0 0.0
    %207 = vmatpush1.msra.mxu0 0.0
    %208 = vmatprep.subr.mxu0 0.0
    %209 = vmatpush1.msra.mxu0 0.0
    %210 = vmatprep.subr.mxu0 0.0
    %211 = vmatpush1.msra.mxu0 0.0
    %212 = vmatprep.subr.mxu0 0.0
    %213 = vmatpush1.msra.mxu0 0.0
    %214 = vmatprep.subr.mxu0 0.0
    %215 = vmatpush1.msra.mxu0 0.0
    %216 = vmatprep.subr.mxu0 0.0
    %217 = vmatpush1.msra.mxu0 0.0
    %218 = vmatprep.subr.mxu0 0.0
    %219 = vmatpush1.msra.mxu0 0.0
    %220 = vmatprep.subr.mxu0 0.0
    %221 = vmatpush1.msra.mxu0 0.0
    %222 = vmatprep.mubr.f32.mxu0 0.0
    %223 = vmatmul.mubr.f32.gmra.mrb[0].mxu0 %v85
    %v224 = vpop.f32.mrb[0].mxu0
    %v225 = vadd.f32 %v79, %v224
    %v226 = vpop.f32.mrb[0].mxu0
    %227 = vdwg.mxu0
    %v228 = vmax.f32 %v154, 0.0
    %v229 = vmax.f32 %v156, 0.0
    %v230 = vmax.f32 %v225, 0.0
    %v231 = vmin.f32 %v228, 6.0
    %v232 = vmin.f32 %v229, 6.0
    %v233 = vmin.f32 %v230, 6.0
    %v234 = vld [vmem:[#allocation6] sm:$0xff]
    %v235 = vld [vmem:[#allocation6 + $0x8] sm:$0xff]
    %v236 = vld [vmem:[#allocation6 + $0x10] sm:$0xff]
    %v237 = vld [vmem:[#allocation6 + $0x18] sm:$0xff]
    %v238 = vld [vmem:[#allocation6 + $0x20] sm:$0xff]
    %v239 = vld [vmem:[#allocation6 + $0x28] sm:$0xff]
    %v240 = vld [vmem:[#allocation6 + $0x30] sm:$0xff]
    %v241 = vld [vmem:[#allocation6 + $0x38] sm:$0xff]
    %v242 = vld [vmem:[#allocation6 + $0x40] sm:$0xff]
    %v243 = vld [vmem:[#allocation6 + $0x48] sm:$0xff]
    %v244 = vld [vmem:[#allocation6 + $0x50] sm:$0xff]
    %v245 = vld [vmem:[#allocation6 + $0x58] sm:$0xff]
    %v246 = vld [vmem:[#allocation6 + $0x60] sm:$0xff]
    %v247 = vld [vmem:[#allocation6 + $0x68] sm:$0xff]
    %v248 = vld [vmem:[#allocation6 + $0x70] sm:$0xff]
    %v249 = vld [vmem:[#allocation6 + $0x78] sm:$0xff]
    %v250 = vld [vmem:[#allocation6 + $0x80] sm:$0xff]
    %v251 = vld [vmem:[#allocation6 + $0x88] sm:$0xff]
    %v252 = vld [vmem:[#allocation6 + $0x90] sm:$0xff]
    %v253 = vld [vmem:[#allocation6 + $0x98] sm:$0xff]
    %v254 = vld [vmem:[#allocation6 + $0xa0] sm:$0xff]
    %v255 = vld [vmem:[#allocation6 + $0xa8] sm:$0xff]
    %v256 = vld [vmem:[#allocation6 + $0xb0] sm:$0xff]
    %v257 = vld [vmem:[#allocation6 + $0xb8] sm:$0xff]
    %v258 = vld [vmem:[#allocation6 + $0xc0] sm:$0xff]
    %v259 = vld [vmem:[#allocation6 + $0xc8] sm:$0xff]
    %v260 = vld [vmem:[#allocation6 + $0xd0] sm:$0xff]
    %v261 = vld [vmem:[#allocation6 + $0xd8] sm:$0xff]
    %v262 = vld [vmem:[#allocation6 + $0xe0] sm:$0xff]
    %v263 = vld [vmem:[#allocation6 + $0xe8] sm:$0xff]
    %v264 = vld [vmem:[#allocation6 + $0xf0] sm:$0xff]
    %v265 = vld [vmem:[#allocation6 + $0xf8] sm:$0xff]
    %v266 = vld [vmem:[#allocation6 + $0x100] sm:$0xff]
    %v267 = vld [vmem:[#allocation6 + $0x108] sm:$0xff]
    %v268 = vld [vmem:[#allocation6 + $0x110] sm:$0xff]
    %v269 = vld [vmem:[#allocation6 + $0x118] sm:$0xff]
    %v270 = vld [vmem:[#allocation6 + $0x120] sm:$0xff]
    %v271 = vld [vmem:[#allocation6 + $0x128] sm:$0xff]
    %v272 = vld [vmem:[#allocation6 + $0x130] sm:$0xff]
    %v273 = vld [vmem:[#allocation6 + $0x138] sm:$0xff]
    %v274 = vld [vmem:[#allocation6 + $0x140] sm:$0xff]
    %v275 = vld [vmem:[#allocation6 + $0x148] sm:$0xff]
    %v276 = vld [vmem:[#allocation6 + $0x150] sm:$0xff]
    %v277 = vld [vmem:[#allocation6 + $0x158] sm:$0xff]
    %v278 = vld [vmem:[#allocation6 + $0x160] sm:$0xff]
    %v279 = vld [vmem:[#allocation6 + $0x168] sm:$0xff]
    %v280 = vld [vmem:[#allocation6 + $0x170] sm:$0xff]
    %v281 = vld [vmem:[#allocation6 + $0x178] sm:$0xff]
    %v282 = vld [vmem:[%s4] sm:$0x1]
    %v284 = vlaneseq
    %v285 = vshrl.u32 %v284, 7
    %v286 = vsub.s32 0, %v285
    %v287 = vrot.slane %v282, %v286
    %289 = vmatprep.subr.mxu0 0.0
    %290 = vmatpush1.msra.mxu0 %v234
    %291 = vmatprep.subr.mxu0 0.0
    %292 = vmatpush1.msra.mxu0 %v235
    %293 = vmatprep.subr.mxu0 0.0
    %294 = vmatpush1.msra.mxu0 %v236
    %295 = vmatprep.subr.mxu0 0.0
    %296 = vmatpush1.msra.mxu0 %v237
    %297 = vmatprep.subr.mxu0 0.0
    %298 = vmatpush1.msra.mxu0 %v238
    %299 = vmatprep.subr.mxu0 0.0
    %300 = vmatpush1.msra.mxu0 %v239
    %301 = vmatprep.subr.mxu0 0.0
    %302 = vmatpush1.msra.mxu0 %v240
    %303 = vmatprep.subr.mxu0 0.0
    %304 = vmatpush1.msra.mxu0 %v241
    %305 = vmatprep.subr.mxu0 0.0
    %306 = vmatpush1.msra.mxu0 %v242
    %307 = vmatprep.subr.mxu0 0.0
    %308 = vmatpush1.msra.mxu0 %v243
    %309 = vmatprep.subr.mxu0 0.0
    %310 = vmatpush1.msra.mxu0 %v244
    %311 = vmatprep.subr.mxu0 0.0
    %312 = vmatpush1.msra.mxu0 %v245
    %313 = vmatprep.subr.mxu0 0.0
    %314 = vmatpush1.msra.mxu0 %v246
    %315 = vmatprep.subr.mxu0 0.0
    %316 = vmatpush1.msra.mxu0 %v247
    %317 = vmatprep.subr.mxu0 0.0
    %318 = vmatpush1.msra.mxu0 %v248
    %319 = vmatprep.subr.mxu0 0.0
    %320 = vmatpush1.msra.mxu0 %v249
    %321 = vmatprep.subr.mxu0 0.0
    %322 = vmatpush1.msra.mxu0 %v250
    %323 = vmatprep.subr.mxu0 0.0
    %324 = vmatpush1.msra.mxu0 %v251
    %325 = vmatprep.subr.mxu0 0.0
    %326 = vmatpush1.msra.mxu0 %v252
    %327 = vmatprep.subr.mxu0 0.0
    %328 = vmatpush1.msra.mxu0 %v253
    %329 = vmatprep.subr.mxu0 0.0
    %330 = vmatpush1.msra.mxu0 %v254
    %331 = vmatprep.subr.mxu0 0.0
    %332 = vmatpush1.msra.mxu0 %v255
    %333 = vmatprep.subr.mxu0 0.0
    %334 = vmatpush1.msra.mxu0 %v256
    %335 = vmatprep.subr.mxu0 0.0
    %336 = vmatpush1.msra.mxu0 %v257
    %337 = vmatprep.subr.mxu0 0.0
    %338 = vmatpush1.msra.mxu0 %v258
    %339 = vmatprep.subr.mxu0 0.0
    %340 = vmatpush1.msra.mxu0 %v259
    %341 = vmatprep.subr.mxu0 0.0
    %342 = vmatpush1.msra.mxu0 %v260
    %343 = vmatprep.subr.mxu0 0.0
    %344 = vmatpush1.msra.mxu0 %v261
    %345 = vmatprep.subr.mxu0 0.0
    %346 = vmatpush1.msra.mxu0 %v262
    %347 = vmatprep.subr.mxu0 0.0
    %348 = vmatpush1.msra.mxu0 %v263
    %349 = vmatprep.subr.mxu0 0.0
    %350 = vmatpush1.msra.mxu0 %v264
    %351 = vmatprep.subr.mxu0 0.0
    %352 = vmatpush1.msra.mxu0 %v265
    %353 = vmatprep.mubr.f32.mxu0 %v232
    %354 = vmatmul.mubr.f32.gmra.mrb[0].mxu0 %v231
    %v355 = vpop.f32.mrb[0].mxu0
    %v356 = vadd.f32 %v287, %v355
    %v357 = vpop.f32.mrb[0].mxu0
    %358 = vdwg.mxu0
    %359 = vmatprep.subr.mxu0 0.0
    %360 = vmatpush1.msra.mxu0 %v266
    %361 = vmatprep.subr.mxu0 0.0
    %362 = vmatpush1.msra.mxu0 %v267
    %363 = vmatprep.subr.mxu0 0.0
    %364 = vmatpush1.msra.mxu0 %v268
    %365 = vmatprep.subr.mxu0 0.0
    %366 = vmatpush1.msra.mxu0 %v269
    %367 = vmatprep.subr.mxu0 0.0
    %368 = vmatpush1.msra.mxu0 %v270
    %369 = vmatprep.subr.mxu0 0.0
    %370 = vmatpush1.msra.mxu0 %v271
    %371 = vmatprep.subr.mxu0 0.0
    %372 = vmatpush1.msra.mxu0 %v272
    %373 = vmatprep.subr.mxu0 0.0
    %374 = vmatpush1.msra.mxu0 %v273
    %375 = vmatprep.subr.mxu0 0.0
    %376 = vmatpush1.msra.mxu0 %v274
    %377 = vmatprep.subr.mxu0 0.0
    %378 = vmatpush1.msra.mxu0 %v275
    %379 = vmatprep.subr.mxu0 0.0
    %380 = vmatpush1.msra.mxu0 %v276
    %381 = vmatprep.subr.mxu0 0.0
    %382 = vmatpush1.msra.mxu0 %v277
    %383 = vmatprep.subr.mxu0 0.0
    %384 = vmatpush1.msra.mxu0 %v278
    %385 = vmatprep.subr.mxu0 0.0
    %386 = vmatpush1.msra.mxu0 %v279
    %387 = vmatprep.subr.mxu0 0.0
    %388 = vmatpush1.msra.mxu0 %v280
    %389 = vmatprep.subr.mxu0 0.0
    %390 = vmatpush1.msra.mxu0 %v281
    %391 = vmatprep.subr.mxu0 0.0
    %392 = vmatpush1.msra.mxu0 0.0
    %393 = vmatprep.subr.mxu0 0.0
    %394 = vmatpush1.msra.mxu0 0.0
    %395 = vmatprep.subr.mxu0 0.0
    %396 = vmatpush1.msra.mxu0 0.0
    %397 = vmatprep.subr.mxu0 0.0
    %398 = vmatpush1.msra.mxu0 0.0
    %399 = vmatprep.subr.mxu0 0.0
    %400 = vmatpush1.msra.mxu0 0.0
    %401 = vmatprep.subr.mxu0 0.0
    %402 = vmatpush1.msra.mxu0 0.0
    %403 = vmatprep.subr.mxu0 0.0
    %404 = vmatpush1.msra.mxu0 0.0
    %405 = vmatprep.subr.mxu0 0.0
    %406 = vmatpush1.msra.mxu0 0.0
    %407 = vmatprep.subr.mxu0 0.0
    %408 = vmatpush1.msra.mxu0 0.0
    %409 = vmatprep.subr.mxu0 0.0
    %410 = vmatpush1.msra.mxu0 0.0
    %411 = vmatprep.subr.mxu0 0.0
    %412 = vmatpush1.msra.mxu0 0.0
    %413 = vmatprep.subr.mxu0 0.0
    %414 = vmatpush1.msra.mxu0 0.0
    %415 = vmatprep.subr.mxu0 0.0
    %416 = vmatpush1.msra.mxu0 0.0
    %417 = vmatprep.subr.mxu0 0.0
    %418 = vmatpush1.msra.mxu0 0.0
    %419 = vmatprep.subr.mxu0 0.0
    %420 = vmatpush1.msra.mxu0 0.0
    %421 = vmatprep.subr.mxu0 0.0
    %422 = vmatpush1.msra.mxu0 0.0
    %423 = vmatprep.mubr.f32.mxu0 0.0
    %424 = vmatmul.mubr.f32.gmra.mrb[0].mxu0 %v233
    %v425 = vpop.f32.mrb[0].mxu0
    %v426 = vadd.f32 %v356, %v425
    %v427 = vpop.f32.mrb[0].mxu0
    %428 = vdwg.mxu0
    %v429 = vlaneseq
    %v430 = vand.u32 %v429, 127
    %v431 = vtanh.pop %v426
    %v432 = vmul.f32 %v431, 2.0
    %v433 = vmax.f32 %v426, 0.0
    %vm434 = vcmp.ne.f32.partialorder %v426, %v426
    %v435 = vadd.f32 %v426, 0.0
    %v436 = vand.u32 2147483647, %v426
    %v437 = vsub.f32 0.0, %v436
    %v438 = vmul.f32 %v437, 1.442695
    %v439 = vpow.pop %v438
    %v440 = vadd.f32 %v439, 1.0
    %v441 = vlog2.pop %v440
    %v442 = vmul.f32 %v441, 0.6931472
    %v443 = vmul.f32 -0.5, %v439
    %v444 = vadd.f32 %v443, 1.0
    %v445 = vmul.f32 %v444, %v439
    %v446 = vand.u32 2147483647, %v439
    %vm447 = vcmp.lt.f32.partialorder %v446, 0.0004427343
    %v448 = vsel %vm447, %v445, %v442
    %v449 = vadd.f32 %v433, %v448
    %v450 = vsel %vm434, %v435, %v449
    %v451 = vadd.f32 %v450, 0.001
    %vm452 = vcmp.lt.s32.totalorder %v430, 4
    %vm453 = vcmp.lt.s32.totalorder %v430, 8
    %v454 = vsel %vm453, %v451, %v426
    %v455 = vsel %vm452, %v432, %v454
    %456 = vst [vmem:[%s5] sm:$0x3] %v455
    // Predicated region
    $region34: #{continuous_net_forward.1} parent=1 // pred_check
      _
    $region35: #{continuous_net_forward.1} parent=1 // pred_check_branch
      %458 = sbr.rel (0) target = $region37
    $region36: #{continuous_net_forward.1} parent=1 // pred_region
      _
    $region37: #{continuous_net_forward.1} parent=1 // pred_fallthru
      _
    // Predicated region
    $region38: #{continuous_net_forward.1} parent=1 // pred_check
      _
    $region39: #{continuous_net_forward.1} parent=1 // pred_check_branch
      %460 = sbr.rel (0) target = $region41
    $region40: #{continuous_net_forward.1} parent=1 // pred_region
      _
    $region41: #{continuous_net_forward.1} parent=1 // pred_fallthru
      _
    %461 = vsyncpa [#allocation3], 1
    %462 = vsyncpa [#allocation5], 1

</llo_original>
